<compile_context>
chip_gen: v7x
topology: tpu7x:2x2x1
jax: 0.10.0
libtpu: 0.0.40
codegen_flags: <defaults>
</compile_context>

<pallas_src>
import math
from functools import partial

import jax
import jax.numpy as jnp
from jax import lax
from jax.experimental import pallas as pl
from jax.experimental.pallas import tpu as pltpu

_LANE = 128


def make_pos_embedding(emb_size: int, maxlen: int = 5000, dtype=jnp.float32):
    """Deterministic buffer, identical formula to the PyTorch __init__."""
    den = jnp.exp(
        -jnp.arange(0, emb_size, 2, dtype=jnp.float32) * math.log(10000.0) / emb_size
    )
    pos = jnp.arange(0, maxlen, dtype=jnp.float32).reshape(maxlen, 1)
    pe = jnp.zeros((maxlen, emb_size), dtype=jnp.float32)
    pe = pe.at[:, 0::2].set(jnp.sin(pos * den))
    pe = pe.at[:, 1::2].set(jnp.cos(pos * den))
    return pe[:, None, :].astype(dtype)  # (maxlen, 1, emb_size)


def _round_up(x: int, m: int) -> int:
    return ((x + m - 1) // m) * m


def _sublane_min(dtype) -> int:
    """Second-minor layout granularity: 8 (f32), 16 (bf16), 32 (int8/fp8)."""
    return max(8, 32 // jnp.dtype(dtype).itemsize)


def _pe_kernel(seed_ref, x_ref, pos_ref, o_ref, *, dropout_p, training):
    x = x_ref[...]
    p = pos_ref[...]
    if p.dtype != x.dtype:          # wrapper already casts; this is free if equal
        p = p.astype(x.dtype)
    # batched path: (tS, B, E) + (tS, 1, E) broadcast over batch
    # row-dense path: (tR, E) + (tR, E)
    y = x + p

    if training and dropout_p >= 1.0:
        y = jnp.zeros_like(y)
    elif training and dropout_p > 0.0:
        shape = y.shape
        # ---- per-block key: seed x grid index, scrambled on the SCALAR unit
        # (off the VPU critical path).  Different blocks -> independent masks,
        # deterministic per seed.
        blk = (seed_ref[0].astype(jnp.uint32) * jnp.uint32(0x9E3779B9)
               + pl.program_id(0).astype(jnp.uint32) * jnp.uint32(0x7FEB352D))
        blk = (blk ^ (blk >> jnp.uint32(15))) * jnp.uint32(0x2C1B3C6D)
        blk = (blk ^ (blk >> jnp.uint32(13))) * jnp.uint32(0x297A2D39)
        blk = blk ^ (blk >> jnp.uint32(15))

        # ---- per-element hash (VPU): local flat counter within the block,
        # xor the scrambled block key, then a slim fmix (2 muls total).
        local = lax.broadcasted_iota(jnp.int32, shape, 0)
        for ax in range(1, len(shape)):
            local = local * shape[ax] + lax.broadcasted_iota(jnp.int32, shape, ax)
        h = (local.astype(jnp.uint32) ^ blk) * jnp.uint32(0x7FEB352D)
        h = (h ^ (h >> jnp.uint32(15))) * jnp.uint32(0x846CA68B)
        h = h ^ (h >> jnp.uint32(16))

        # keep iff h >= p * 2^32 (raw uint32 threshold, no float RNG math)
        thr = jnp.uint32(min(int(round(dropout_p * 2.0 ** 32)), 2 ** 32 - 1))
        keep = h >= thr
        scale = jnp.asarray(1.0 / (1.0 - dropout_p), dtype=y.dtype)
        y = jnp.where(keep, y * scale, jnp.zeros_like(y))

    o_ref[...] = y.astype(o_ref.dtype)


def positional_encoding(
    token_embedding,      # (S, B, E)
    pos_embedding,        # (maxlen, 1, E)  -- the registered buffer
    *,
    dropout_p: float = 0.1,
    training: bool = False,
    seed: int = 0,
    donate_input: bool = False,
    block_budget_bytes: int = 8 << 20,   # total double-buffered VMEM target
):
    S, B, E = token_embedding.shape
    maxlen = pos_embedding.shape[0]
    assert S <= maxlen, "sequence length exceeds positional table"
    assert pos_embedding.shape == (maxlen, 1, E)

    dtype = token_embedding.dtype
    itemsize = jnp.dtype(dtype).itemsize
    sub = _sublane_min(dtype)                  # sublane granularity for dtype
    e_pad = _round_up(E, _LANE)                # lane padding (E % 128 == 0 ideal)

    if pos_embedding.dtype != dtype:
        # Store/pass the table in the activation dtype once (halves table DMA
        # for bf16 activations, no per-step converts on the VPU).
        pos_embedding = pos_embedding.astype(dtype)

    seed_arr = jnp.asarray([seed], dtype=jnp.int32)
    kernel = partial(_pe_kernel, dropout_p=float(dropout_p), training=bool(training))
    apply_dropout = bool(training) and float(dropout_p) > 0.0

    # Row-dense layout only pays off when sublane padding would otherwise make
    # the dropout hash VALU-bound; eval / p==0 stays on the traffic-optimal
    # batched path (one add hides under HBM even with padding).
    row_dense = apply_dropout and (B < sub)

    if row_dense:
        # Dense (S*B, E) view of the activations (free reshape: contiguous) and
        # a pre-broadcast pos operand so the kernel is pure dense element-wise
        # work.  Costs one extra O(S*B*E) pos operand of HBM traffic; still a
        # clear win over (sub/B)x padded VPU work in training mode.
        rows = S * B
        x2 = token_embedding.reshape(rows, E)
        pos2 = jnp.broadcast_to(pos_embedding[:S], (S, B, E)).reshape(rows, E)

        per_row = 6 * e_pad * itemsize                       # x(2)+pos(2)+out(2)
        t_budget = max(sub, (block_budget_bytes // per_row) // sub * sub)
        t_cap = max(sub, _round_up(pl.cdiv(rows, 8), sub))   # keep >= ~8 steps
        tile = int(min(t_budget, t_cap, _round_up(rows, sub)))
        grid = (pl.cdiv(rows, tile),)
        vmem_need = per_row * tile

        in_specs = [pl.BlockSpec((tile, E), lambda r, seed: (r, 0)),
                    pl.BlockSpec((tile, E), lambda r, seed: (r, 0))]
        out_specs = pl.BlockSpec((tile, E), lambda r, seed: (r, 0))
        out_shape = jax.ShapeDtypeStruct((rows, E), dtype)
        operands = (seed_arr, x2, pos2)
    else:
        # Batched path: contiguous (tS, B, E) blocks, pos table walked directly
        # (O(S*E) pos DMA).  Padded VMEM per seq row:
        #   x(2 bufs)+out(2 bufs) of (1, B_pad, E_pad) and pos(2) of (1, sub, E_pad)
        b_pad = _round_up(B, sub)
        per_row = (4 * b_pad + 2 * sub) * e_pad * itemsize
        t_budget = max(sub, (block_budget_bytes // per_row) // sub * sub)
        t_cap = max(sub, _round_up(pl.cdiv(S, 8), sub))      # keep >= ~8 steps
        tile = int(min(t_budget, t_cap, _round_up(S, sub)))
        grid = (pl.cdiv(S, tile),)
        vmem_need = per_row * tile

        in_specs = [pl.BlockSpec((tile, B, E), lambda s, seed: (s, 0, 0)),
                    pl.BlockSpec((tile, 1, E), lambda s, seed: (s, 0, 0))]
        out_specs = pl.BlockSpec((tile, B, E), lambda s, seed: (s, 0, 0))
        out_shape = jax.ShapeDtypeStruct((S, B, E), dtype)
        operands = (seed_arr, token_embedding, pos_embedding)

    # >= 32 MiB (v5e's default scoped limit is 16 MiB); raised further only if
    # a single padded row set is huge (the padding-aware estimate makes this exact).
    vmem_limit = max(32 << 20, int(vmem_need * 1.25) + (2 << 20))

    out = pl.pallas_call(
        kernel,
        out_shape=out_shape,
        grid_spec=pltpu.PrefetchScalarGridSpec(
            num_scalar_prefetch=1,                 # seed lands in SMEM
            grid=grid,
            in_specs=in_specs,
            out_specs=out_specs,
        ),
        compiler_params=pltpu.CompilerParams(
            dimension_semantics=("parallel",),     # megacore split on v7x
            vmem_limit_bytes=int(vmem_limit),
        ),
        # operand index 1 == token_embedding (index 0 is the prefetched seed);
        # enable only when the caller donates the embedding buffer.
        input_output_aliases=({1: 0} if donate_input else {}),
    )(*operands)

    return out.reshape(S, B, E) if row_dense else out


if __name__ == "__main__":
    key = jax.random.PRNGKey(0)
    maxlen = 64
    p = 0.1

    # --- small-batch config: eval uses the batched path, training uses the
    #     row-dense (S*B, E) path ---------------------------------------------
    S, B, E = 16, 2, 128
    pe_buf = make_pos_embedding(E, maxlen=maxlen)           # (maxlen, 1, E)
    x = jax.random.normal(key, (S, B, E), dtype=jnp.float32)
    ref = x + pe_buf[:S]                                    # broadcast over batch

    out = positional_encoding(x, pe_buf, dropout_p=p, training=False)
    jax.block_until_ready(out)
    assert out.shape == (S, B, E) and out.dtype == x.dtype
    assert jnp.allclose(out, ref, atol=1e-6), "eval-mode mismatch vs reference"

    out_tr = positional_encoding(x, pe_buf, dropout_p=p, training=True, seed=42)
    jax.block_until_ready(out_tr)
    scaled = ref / (1.0 - p)
    assert jnp.allclose(out_tr, jnp.where(out_tr == 0, 0.0, scaled), atol=1e-5), \
        "training-mode values are neither dropped nor correctly scaled"
    frac_zero = float(jnp.mean((out_tr == 0).astype(jnp.float32)))
    assert 0.0 < frac_zero < 0.5, f"implausible dropout fraction: {frac_zero}"

    # --- batch >= sublane-min config: exercises the batched path in training too
    S2, B2, E2 = 16, 8, 128
    pe2 = make_pos_embedding(E2, maxlen=maxlen)
    x2 = jax.random.normal(jax.random.PRNGKey(1), (S2, B2, E2), dtype=jnp.float32)
    ref2 = x2 + pe2[:S2]

    out2 = positional_encoding(x2, pe2, dropout_p=p, training=False)
    out2_tr = positional_encoding(x2, pe2, dropout_p=p, training=True, seed=7)
    jax.block_until_ready((out2, out2_tr))
    assert jnp.allclose(out2, ref2, atol=1e-6), "eval-mode mismatch (B=8)"
    scaled2 = ref2 / (1.0 - p)
    assert jnp.allclose(out2_tr, jnp.where(out2_tr == 0, 0.0, scaled2), atol=1e-5), \
        "training-mode mismatch (B=8)"
    frac_zero2 = float(jnp.mean((out2_tr == 0).astype(jnp.float32)))
    assert 0.0 < frac_zero2 < 0.5, f"implausible dropout fraction: {frac_zero2}"

    print("KERNEL_OK")
</pallas_src>

<mosaic_0001>
module attributes {stable_mosaic.version = 11 : i64} {
  func.func @_pe_kernel(%arg0: i32, %arg1: memref<1xi32, #tpu.memory_space<smem>>, %arg2: memref<8x2x128xf32, #tpu.memory_space<vmem>>, %arg3: memref<8x1x128xf32, #tpu.memory_space<vmem>>, %arg4: memref<8x2x128xf32, #tpu.memory_space<vmem>>) attributes {dimension_semantics = [#tpu.dimension_semantics<parallel>], iteration_bounds = array<i64: 2>, scalar_prefetch = 1 : i64, scratch_operands = 0 : i64, tpu.core_type = #tpu.core_type<tc>, window_params = [{transform_indices = @transform_0, window_bounds = array<i64: 8, 2, 128>}, {transform_indices = @transform_1, window_bounds = array<i64: 8, 1, 128>}, {transform_indices = @transform_2, window_bounds = array<i64: 8, 2, 128>}]} {
    %c0 = arith.constant 0 : index
    %c0_0 = arith.constant 0 : index
    %c0_1 = arith.constant 0 : index
    %0 = vector.load %arg2[%c0, %c0_0, %c0_1] : memref<8x2x128xf32, #tpu.memory_space<vmem>>, vector<8x2x128xf32>
    %c0_2 = arith.constant 0 : index
    %c0_3 = arith.constant 0 : index
    %c0_4 = arith.constant 0 : index
    %1 = vector.load %arg3[%c0_2, %c0_3, %c0_4] : memref<8x1x128xf32, #tpu.memory_space<vmem>>, vector<8x1x128xf32>
    %2 = vector.broadcast %1 : vector<8x1x128xf32> to vector<8x2x128xf32>
    %3 = arith.addf %0, %2 : vector<8x2x128xf32>
    %c0_5 = arith.constant 0 : index
    %c0_6 = arith.constant 0 : index
    %c0_7 = arith.constant 0 : index
    %4 = vector.load %arg4[%c0_5, %c0_6, %c0_7] : memref<8x2x128xf32, #tpu.memory_space<vmem>>, vector<8x2x128xf32>
    tpu.vector_store %arg4[%c0_5, %c0_6, %c0_7], %3 {strides = array<i32>} : memref<8x2x128xf32, #tpu.memory_space<vmem>>, vector<8x2x128xf32>,
    return
  }
  func.func @transform_0(%arg0: i32, %arg1: memref<1xi32, #tpu.memory_space<smem>>) -> (i32, i32, i32) {
    %c0_i32 = arith.constant 0 : i32
    %c0_i32_0 = arith.constant 0 : i32
    %c0_i32_1 = arith.constant 0 : i32
    return %arg0, %c0_i32, %c0_i32_0 : i32, i32, i32
  }
  func.func @transform_1(%arg0: i32, %arg1: memref<1xi32, #tpu.memory_space<smem>>) -> (i32, i32, i32) {
    %c0_i32 = arith.constant 0 : i32
    %c0_i32_0 = arith.constant 0 : i32
    %c0_i32_1 = arith.constant 0 : i32
    return %arg0, %c0_i32, %c0_i32_0 : i32, i32, i32
  }
  func.func @transform_2(%arg0: i32, %arg1: memref<1xi32, #tpu.memory_space<smem>>) -> (i32, i32, i32) {
    %c0_i32 = arith.constant 0 : i32
    %c0_i32_0 = arith.constant 0 : i32
    %c0_i32_1 = arith.constant 0 : i32
    return %arg0, %c0_i32, %c0_i32_0 : i32, i32, i32
  }
}

</mosaic_0001>

<llo_original>
// kernel: tpu_custom_call.1
$region0: #{tpu_custom_call.1}
  #allocation0 [shape = 'u32[]', space=smem, size = 0x4, offset = 0x4, fixed_abs, tag = 'smem constant byte address 0x4 - core index']
  #allocation1 [shape = 'u32[144,128]{1,0:T(1,128)}', space=vmem, size = 0x12000, scoped, tag = 'internal scratch']
  #allocation2 [shape = 's32[1]{0}', space=sflag, size = 0x4, scoped, tag = 'scoped memory for tpu_custom_call.1']
  #allocation3 [shape = 's32[1]{0:T(128)S(6)}', space=smem, size = 0x200, scoped, tag = 'prefetched SMEM operand 0']
  %s0 = inlined_call_operand.<no memory space> [shape: s32[1], index: 0, kind: input, shape index: {}]
  %s1 = inlined_call_operand.hbm [shape: f32[16,2,128], index: 1, kind: input, shape index: {}]
  %s2 = inlined_call_operand.hbm [shape: f32[64,1,128], index: 2, kind: input, shape index: {}]
  %s3 = inlined_call_operand.hbm [shape: f32[16,2,128], index: 3, kind: output, shape index: {}]
  %s4 = sld [smem:[#allocation0]]
  $region49: #{tpu_custom_call.1} parent=0
    _
  %s6 = ssub.s32 1, %s4
  %s7 = scalar_select 0, %s6, %s4
  %8 = sst [smem:[#allocation3]] %s0
  $region1: #{tpu_custom_call.1} parent=0
    #allocation4 [shape = 'u8[16384]{0}', space=vmem, size = 0x4000, scoped, tag = 'input window, operand 1']
    #allocation5 [shape = 's32[2]{0}', space=sflag, size = 0x8, scoped, tag = 'scoped memory for tpu_custom_call.1']
    #allocation6 [shape = 's32[2]{0}', space=sflag, size = 0x8, scoped, tag = 'scoped memory for tpu_custom_call.1']
    #allocation7 [shape = 'u8[8192]{0}', space=vmem, size = 0x2000, scoped, tag = 'input window, operand 2']
    #allocation8 [shape = 's32[2]{0}', space=sflag, size = 0x8, scoped, tag = 'scoped memory for tpu_custom_call.1']
    #allocation9 [shape = 'u8[16384]{0}', space=vmem, size = 0x4000, scoped, tag = 'output window, operand 0']
    %9 = vsyncpa [#allocation5], 0
    %s10 = scalar_lea.sflag [#allocation5], 1
    %11 = vsyncpa %s10, 0
    %12 = vsyncpa [#allocation8], 0
    %s13 = scalar_lea.sflag [#allocation8], 1
    %14 = vsyncpa %s13, 0
    %15 = vsyncpa [#allocation6], 0
    %s16 = scalar_lea.sflag [#allocation6], 1
    %17 = vsyncpa %s16, 0
    loop: start=0, step=1, limit=4
    $region2: #{tpu_custom_call.1} parent=1 // loop_pre_header
      _
    $region3: #{tpu_custom_call.1} parent=1 // loop_header
      %s19 = sphi 0, %s23
      %p20 = scmp.ge.s32.totalorder %s19, 4
      %s29 = sphi 0, %s31
      %s32 = sphi 0, %s29
      %s33 = sphi 0, %s32
      %s49 = sphi 0, %s33
      %s55 = sphi 0, %s57
      %s58 = sphi 0, %s55
      %s59 = sphi 0, %s58
      %s75 = sphi 0, %s59
      %s81 = sphi 0, %s83
      %s84 = sphi 0, %s81
      %s85 = sphi 0, %s84
      %s101 = sphi 0, %s85
    $region4: #{tpu_custom_call.1} parent=1 // loop_header_branch
      %22 = sbr.rel (%p20) target = $region8
    $region5: #{tpu_custom_call.1} parent=1 // loop_body
      %s24 = ssub.s32 %s19, 1
      %s25 = ssub.s32 %s19, 2
      %s26 = sadd.s32 %s19, 1
      %s27 = ssub.s32 %s19, %s26
      %p28 = scmp.eq.s32.totalorder %s27, 0
      %s30 = sadd.s32 %s29, 1
      %s31 = scalar_select %p28, %s29, %s30
      %p34 = pneg %p28
      %p35 = scmp.eq.s32.totalorder %s19, 1
      %p36 = por %p34, %p35
      %p37 = scmp.ne.s32.totalorder %s29, %s32
      %p38 = scmp.eq.s32.totalorder %s19, 0
      %p39 = por %p37, %p38
      %p40 = scmp.ne.s32.totalorder %s29, %s32
      %p41 = scmp.eq.s32.totalorder %s24, 1
      %p42 = por %p40, %p41
      %p43 = scmp.ne.s32.totalorder %s32, %s33
      %p44 = scmp.eq.s32.totalorder %s24, 0
      %p45 = por %p43, %p44
      %p46 = scmp.ne.s32.totalorder %s32, %s33
      %p47 = scmp.eq.s32.totalorder %s25, 1
      %p48 = por %p46, %p47
      %p50 = scmp.ne.s32.totalorder %s33, %s49
      %p51 = scmp.eq.s32.totalorder %s25, 0
      %p52 = por %p50, %p51
      %s53 = ssub.s32 %s19, %s26
      %p54 = scmp.eq.s32.totalorder %s53, 0
      %s56 = sadd.s32 %s55, 1
      %s57 = scalar_select %p54, %s55, %s56
      %p60 = pneg %p54
      %p61 = scmp.eq.s32.totalorder %s19, 1
      %p62 = por %p60, %p61
      %p63 = scmp.ne.s32.totalorder %s55, %s58
      %p64 = scmp.eq.s32.totalorder %s19, 0
      %p65 = por %p63, %p64
      %p66 = scmp.ne.s32.totalorder %s55, %s58
      %p67 = scmp.eq.s32.totalorder %s24, 1
      %p68 = por %p66, %p67
      %p69 = scmp.ne.s32.totalorder %s58, %s59
      %p70 = scmp.eq.s32.totalorder %s24, 0
      %p71 = por %p69, %p70
      %p72 = scmp.ne.s32.totalorder %s58, %s59
      %p73 = scmp.eq.s32.totalorder %s25, 1
      %p74 = por %p72, %p73
      %p76 = scmp.ne.s32.totalorder %s59, %s75
      %p77 = scmp.eq.s32.totalorder %s25, 0
      %p78 = por %p76, %p77
      %s79 = ssub.s32 %s19, %s26
      %p80 = scmp.eq.s32.totalorder %s79, 0
      %s82 = sadd.s32 %s81, 1
      %s83 = scalar_select %p80, %s81, %s82
      %p86 = pneg %p80
      %p87 = scmp.eq.s32.totalorder %s19, 1
      %p88 = por %p86, %p87
      %p89 = scmp.ne.s32.totalorder %s81, %s84
      %p90 = scmp.eq.s32.totalorder %s19, 0
      %p91 = por %p89, %p90
      %p92 = scmp.ne.s32.totalorder %s81, %s84
      %p93 = scmp.eq.s32.totalorder %s24, 1
      %p94 = por %p92, %p93
      %p95 = scmp.ne.s32.totalorder %s84, %s85
      %p96 = scmp.eq.s32.totalorder %s24, 0
      %p97 = por %p95, %p96
      %p98 = scmp.ne.s32.totalorder %s84, %s85
      %p99 = scmp.eq.s32.totalorder %s25, 1
      %p100 = por %p98, %p99
      %p102 = scmp.ne.s32.totalorder %s85, %s101
      %p103 = scmp.eq.s32.totalorder %s25, 0
      %p104 = por %p102, %p103
      %p105 = scmp.le.s32.totalorder 1, %s19
      %p106 = scmp.lt.s32.totalorder %s19, 3
      %p107 = pnand %p105, %p106
      %p108 = pneg %p107
      // Predicated region
      $region9: #{tpu_custom_call.1} parent=5 // pred_check
        _
      $region10: #{tpu_custom_call.1} parent=5 // pred_check_branch
        %110 = sbr.rel (%p107) target = $region12
      $region11: #{tpu_custom_call.1} parent=5 // pred_region
        %s111 = ssub.s32 %s19, 1
      $region12: #{tpu_custom_call.1} parent=5 // pred_fallthru
        _
      %p112 = scmp.lt.s32.totalorder %s19, 2
      // Predicated region
      $region13: #{tpu_custom_call.1} parent=5 // pred_check
        %p113 = pneg %p112
      $region14: #{tpu_custom_call.1} parent=5 // pred_check_branch
        %115 = sbr.rel (%p113) target = $region16
      $region15: #{tpu_custom_call.1} parent=5 // pred_region
        // Predicated region
        $region17: #{tpu_custom_call.1} parent=15 // pred_check
          %p116 = pneg %p39
        $region18: #{tpu_custom_call.1} parent=15 // pred_check_branch
          %118 = sbr.rel (%p116) target = $region20
        $region19: #{tpu_custom_call.1} parent=15 // pred_region
          %s119 = sand.u32 %s29, 1
          %s120 = scalar_lea.sflag [#allocation5], %s119
          %s121 = sand.u32 %s29, 1
          %s122 = smul.addr %s121, 16
          %s123 = scalar_lea.vmem [#allocation4], %s122
          %s124 = smul.u32 8, %s19
          %s126 = ssub.s32 256, 256
          %127 = vsyncadd %s120, %s126
          %s128 = smul.addr %s124, 32
          %s129 = scalar_lea.hbm %s1, %s128
          %s130 = sshll.u32 %s123, 4
          %s131 = int_to_ptr.vmem [resolvable:$true] %s130
          %136 = dma.hbm_to_vmem [thread:$0]  %s129, 256, %s131, %s120, 32, 32, 2
        $region20: #{tpu_custom_call.1} parent=15 // pred_fallthru
          _
        // Predicated region
        $region21: #{tpu_custom_call.1} parent=15 // pred_check
          %p137 = pneg %p65
        $region22: #{tpu_custom_call.1} parent=15 // pred_check_branch
          %139 = sbr.rel (%p137) target = $region24
        $region23: #{tpu_custom_call.1} parent=15 // pred_region
          %s140 = sand.u32 %s55, 1
          %s141 = scalar_lea.sflag [#allocation8], %s140
          %s142 = sand.u32 %s55, 1
          %s143 = smul.addr %s142, 8
          %s144 = scalar_lea.vmem [#allocation7], %s143
          %s145 = smul.u32 8, %s19
          %s147 = ssub.s32 128, 128
          %148 = vsyncadd %s141, %s147
          %s149 = smul.addr %s145, 16
          %s150 = scalar_lea.hbm %s2, %s149
          %s151 = sshll.u32 %s144, 4
          %s152 = int_to_ptr.vmem [resolvable:$true] %s151
          %157 = dma.hbm_to_vmem [thread:$0]  %s150, 128, %s152, %s141, 16, 16, 1
        $region24: #{tpu_custom_call.1} parent=15 // pred_fallthru
          _
      $region16: #{tpu_custom_call.1} parent=5 // pred_fallthru
        _
      %p158 = scmp.le.s32.totalorder 1, %s19
      %p159 = scmp.lt.s32.totalorder %s19, 3
      %p160 = pnand %p158, %p159
      %p161 = pneg %p160
      // Predicated region
      $region25: #{tpu_custom_call.1} parent=5 // pred_check
        _
      $region26: #{tpu_custom_call.1} parent=5 // pred_check_branch
        %163 = sbr.rel (%p160) target = $region28
      $region27: #{tpu_custom_call.1} parent=5 // pred_region
        %s164 = ssub.s32 %s19, 1
        %s165 = sand.u32 %s32, 1
        %s166 = scalar_lea.sflag [#allocation5], %s165
        %s167 = sand.u32 %s32, 1
        %s168 = smul.addr %s167, 16
        %s169 = scalar_lea.vmem [#allocation4], %s168
        // Predicated region
        $region29: #{tpu_custom_call.1} parent=27 // pred_check
          %p170 = pneg %p45
        $region30: #{tpu_custom_call.1} parent=27 // pred_check_branch
          %172 = sbr.rel (%p170) target = $region32
        $region31: #{tpu_custom_call.1} parent=27 // pred_region
          %173 = dma.done %s166, 256
        $region32: #{tpu_custom_call.1} parent=27 // pred_fallthru
          _
        %s174 = sand.u32 %s58, 1
        %s175 = scalar_lea.sflag [#allocation8], %s174
        %s176 = sand.u32 %s58, 1
        %s177 = smul.addr %s176, 8
        %s178 = scalar_lea.vmem [#allocation7], %s177
        // Predicated region
        $region33: #{tpu_custom_call.1} parent=27 // pred_check
          %p179 = pneg %p71
        $region34: #{tpu_custom_call.1} parent=27 // pred_check_branch
          %181 = sbr.rel (%p179) target = $region36
        $region35: #{tpu_custom_call.1} parent=27 // pred_region
          %182 = dma.done %s175, 128
        $region36: #{tpu_custom_call.1} parent=27 // pred_fallthru
          _
        %s183 = sand.u32 %s32, 1
        %s184 = scalar_lea.sflag [#allocation5], %s183
        %s185 = sand.u32 %s32, 1
        %s186 = smul.addr %s185, 16
        %s187 = scalar_lea.vmem [#allocation4], %s186
        %p188 = pneg %p45
        %p189 = pneg %p42
        %s190 = sand.u32 %s58, 1
        %s191 = scalar_lea.sflag [#allocation8], %s190
        %s192 = sand.u32 %s58, 1
        %s193 = smul.addr %s192, 8
        %s194 = scalar_lea.vmem [#allocation7], %s193
        %p195 = pneg %p71
        %p196 = pneg %p68
        %p197 = pneg %p97
        %p198 = pneg %p94
        %s199 = sand.u32 %s84, 1
        %s200 = scalar_lea.sflag [#allocation6], %s199
        %s201 = sand.u32 %s84, 1
        %s202 = smul.addr %s201, 16
        %s203 = scalar_lea.vmem [#allocation9], %s202
        %s204 = smul.u32 8, %s24
        %s205 = smul.u32 8, %s24
        %s206 = smul.u32 8, %s24
        %v207 = vld [vmem:[%s169] sm:$0x3]
        %v208 = vld [vmem:[%s169 + $0x2] sm:$0x3]
        %v209 = vld [vmem:[%s169 + $0x4] sm:$0x3]
        %v210 = vld [vmem:[%s169 + $0x6] sm:$0x3]
        %v211 = vld [vmem:[%s169 + $0x8] sm:$0x3]
        %v212 = vld [vmem:[%s169 + $0xa] sm:$0x3]
        %v213 = vld [vmem:[%s169 + $0xc] sm:$0x3]
        %v214 = vld [vmem:[%s169 + $0xe] sm:$0x3]
        %v215 = vld [vmem:[%s178] sm:$0x1]
        %v216 = vld [vmem:[%s178 + $0x1] sm:$0x1]
        %v217 = vld [vmem:[%s178 + $0x2] sm:$0x1]
        %v218 = vld [vmem:[%s178 + $0x3] sm:$0x1]
        %v219 = vld [vmem:[%s178 + $0x4] sm:$0x1]
        %v220 = vld [vmem:[%s178 + $0x5] sm:$0x1]
        %v221 = vld [vmem:[%s178 + $0x6] sm:$0x1]
        %v222 = vld [vmem:[%s178 + $0x7] sm:$0x1]
        %v231 = vlaneseq
        %v232 = vshrl.u32 %v231, 7
        %v233 = vsub.s32 0, %v232
        %v234 = vrot.slane %v215, %v233
        %v235 = vlaneseq
        %v236 = vshrl.u32 %v235, 7
        %v237 = vsub.s32 0, %v236
        %v238 = vrot.slane %v216, %v237
        %v239 = vlaneseq
        %v240 = vshrl.u32 %v239, 7
        %v241 = vsub.s32 0, %v240
        %v242 = vrot.slane %v217, %v241
        %v243 = vlaneseq
        %v244 = vshrl.u32 %v243, 7
        %v245 = vsub.s32 0, %v244
        %v246 = vrot.slane %v218, %v245
        %v247 = vlaneseq
        %v248 = vshrl.u32 %v247, 7
        %v249 = vsub.s32 0, %v248
        %v250 = vrot.slane %v219, %v249
        %v251 = vlaneseq
        %v252 = vshrl.u32 %v251, 7
        %v253 = vsub.s32 0, %v252
        %v254 = vrot.slane %v220, %v253
        %v255 = vlaneseq
        %v256 = vshrl.u32 %v255, 7
        %v257 = vsub.s32 0, %v256
        %v258 = vrot.slane %v221, %v257
        %v259 = vlaneseq
        %v260 = vshrl.u32 %v259, 7
        %v261 = vsub.s32 0, %v260
        %v262 = vrot.slane %v222, %v261
        %v271 = vadd.f32 %v207, %v234
        %v272 = vadd.f32 %v208, %v238
        %v273 = vadd.f32 %v209, %v242
        %v274 = vadd.f32 %v210, %v246
        %v275 = vadd.f32 %v211, %v250
        %v276 = vadd.f32 %v212, %v254
        %v277 = vadd.f32 %v213, %v258
        %v278 = vadd.f32 %v214, %v262
        %279 = vst [vmem:[%s203] sm:$0x3] %v271
        %280 = vst [vmem:[%s203 + $0x2] sm:$0x3] %v272
        %281 = vst [vmem:[%s203 + $0x4] sm:$0x3] %v273
        %282 = vst [vmem:[%s203 + $0x6] sm:$0x3] %v274
        %283 = vst [vmem:[%s203 + $0x8] sm:$0x3] %v275
        %284 = vst [vmem:[%s203 + $0xa] sm:$0x3] %v276
        %285 = vst [vmem:[%s203 + $0xc] sm:$0x3] %v277
        %286 = vst [vmem:[%s203 + $0xe] sm:$0x3] %v278
        %s287 = sand.u32 %s84, 1
        %s288 = scalar_lea.sflag [#allocation6], %s287
        %s289 = sand.u32 %s84, 1
        %s290 = smul.addr %s289, 16
        %s291 = scalar_lea.vmem [#allocation9], %s290
        // Predicated region
        $region37: #{tpu_custom_call.1} parent=27 // pred_check
          %p292 = pneg %p94
        $region38: #{tpu_custom_call.1} parent=27 // pred_check_branch
          %294 = sbr.rel (%p292) target = $region40
        $region39: #{tpu_custom_call.1} parent=27 // pred_region
          %s295 = smul.u32 8, %s24
          %s297 = ssub.s32 256, 256
          %298 = vsyncadd %s288, %s297
          %s299 = smul.addr %s295, 32
          %s300 = scalar_lea.hbm %s3, %s299
          %s301 = sshll.u32 %s291, 4
          %s302 = int_to_ptr.vmem [resolvable:$true] %s301
          %307 = dma.vmem_to_hbm [thread:$0]  %s302, 256, %s300, %s288, 32, 32, 2
        $region40: #{tpu_custom_call.1} parent=27 // pred_fallthru
          _
      $region28: #{tpu_custom_call.1} parent=5 // pred_fallthru
        _
      %p308 = scmp.le.s32.totalorder 2, %s19
      // Predicated region
      $region41: #{tpu_custom_call.1} parent=5 // pred_check
        %p309 = pneg %p308
      $region42: #{tpu_custom_call.1} parent=5 // pred_check_branch
        %311 = sbr.rel (%p309) target = $region44
      $region43: #{tpu_custom_call.1} parent=5 // pred_region
        %s312 = ssub.s32 %s19, 2
        // Predicated region
        $region45: #{tpu_custom_call.1} parent=43 // pred_check
          %p313 = pneg %p100
        $region46: #{tpu_custom_call.1} parent=43 // pred_check_branch
          %315 = sbr.rel (%p313) target = $region48
        $region47: #{tpu_custom_call.1} parent=43 // pred_region
          %s316 = sand.u32 %s85, 1
          %s317 = scalar_lea.sflag [#allocation6], %s316
          %s318 = sand.u32 %s85, 1
          %s319 = smul.addr %s318, 16
          %s320 = scalar_lea.vmem [#allocation9], %s319
          %321 = dma.done %s317, 256
        $region48: #{tpu_custom_call.1} parent=43 // pred_fallthru
          _
      $region44: #{tpu_custom_call.1} parent=5 // pred_fallthru
        _
    $region6: #{tpu_custom_call.1} parent=1 // loop_footer
      %s23 = sadd.s32 1, %s19
    $region7: #{tpu_custom_call.1} parent=1 // loop_footer_branch
      %18 = sbr.rel target = $region3
    $region8: #{tpu_custom_call.1} parent=1 // loop_exit
      _
    %322 = vsyncpa [#allocation5], 1
    %s323 = scalar_lea.sflag [#allocation5], 1
    %324 = vsyncpa %s323, 1
    %325 = vsyncpa [#allocation8], 1
    %s326 = scalar_lea.sflag [#allocation8], 1
    %327 = vsyncpa %s326, 1
    %328 = vsyncpa [#allocation6], 1
    %s329 = scalar_lea.sflag [#allocation6], 1
    %330 = vsyncpa %s329, 1

</llo_original>
